<compile_context>
chip_gen: v6e
topology: v6e:2x2x1
jax: 0.10.0
libtpu: 0.0.40
codegen_flags: <defaults>
</compile_context>

<pallas_src>
import functools

import jax
import jax.numpy as jnp
from jax.experimental import pallas as pl
from jax.experimental.pallas import tpu as pltpu


def _round_up(x, m):
    return ((x + m - 1) // m) * m


def prepare_params(params, *, compute_dtype=jnp.bfloat16):
    """One-time parameter prep (hoisted out of the per-call forward).

    Reshapes biases / the time-enc affine to (1, D) rows and casts the matmul
    weights to the MXU-native compute dtype (bf16 by default).  Call once per
    ODE trajectory and reuse the result for every solver evaluation.
    """
    z_dim, h_dim = params["w1"].shape
    f32 = jnp.float32
    return {
        "wt": params["wt"].reshape(1, z_dim).astype(f32),
        "bt": params["bt"].reshape(1, z_dim).astype(f32),
        "w1": params["w1"].astype(compute_dtype),
        "b1": params["b1"].reshape(1, h_dim).astype(f32),
        "w2": params["w2"].astype(compute_dtype),
        "b2": params["b2"].reshape(1, h_dim).astype(f32),
        "w3": params["w3"].astype(compute_dtype),
        "b3": params["b3"].reshape(1, z_dim).astype(f32),
    }


def _ode_func_kernel(s_ref,                      # (1,1) f32 in SMEM: solver time s
                     z_ref, ts_ref, t0_ref,      # (tm,Dz), (tm,1), (tm,1)
                     wt_ref, bt_ref,             # (1,Dz)  time-enc affine (f32)
                     w1_ref, b1_ref,             # (Dz,Dh), (1,Dh)
                     w2_ref, b2_ref,             # (Dh,Dh), (1,Dh)
                     w3_ref, b3_ref,             # (Dh,Dz), (1,Dz)
                     dz_ref,                     # (tm,Dz) output
                     *, start_time, end_time):
    f32 = jnp.float32
    inv_span = 1.0 / (end_time - start_time)

    s = s_ref[0, 0]
    ts = ts_ref[...].astype(f32)                   # (tm, 1)
    t0 = t0_ref[...].astype(f32)                   # (tm, 1)
    ratio = (ts - t0) * inv_span                   # (tm, 1)
    t = (s - start_time) * ratio + t0              # (tm, 1)

    # time_enc modeled as Linear(1 -> z_dim): rank-1 broadcast (VPU only).
    t_enc = t * wt_ref[...] + bt_ref[...]          # (tm, Dz), f32
    h0 = z_ref[...].astype(f32) + t_enc

    # MXU path: dot in the stored weight dtype (bf16 from prepare_params),
    # f32 accumulation; tanh on the compute-dtype pre-activation (bf16 EUP
    # path on v6e/v7x, compiler handles v5e).
    cdt = w1_ref.dtype
    a1 = jnp.dot(h0.astype(cdt), w1_ref[...], preferred_element_type=f32) + b1_ref[...]
    h1 = jnp.tanh(a1.astype(cdt))
    a2 = jnp.dot(h1, w2_ref[...], preferred_element_type=f32) + b2_ref[...]
    h2 = jnp.tanh(a2.astype(cdt))
    dz = jnp.dot(h2, w3_ref[...], preferred_element_type=f32) + b3_ref[...]
    dz_ref[...] = (dz * ratio).astype(dz_ref.dtype)


def ode_func_forward(s, x, prep, *, start_time, end_time, tm=512):
    """JAX/Pallas equivalent of ODEFunc.forward(s, x).

    s: scalar ODE time. x = (z, ts, t_0) with z: (B, z_dim), ts/t_0: (B, 1).
    `prep` is the output of prepare_params() (reused across the trajectory).
    Returns (dz, ts, t_0) with dz: (B, z_dim).
    """
    z, ts, t0 = x
    B, Dz = z.shape
    Dh = prep["w1"].shape[1]
    ts2 = ts.reshape(B, 1)
    t02 = t0.reshape(B, 1)

    # Row tiling: >= 2 grid steps once B > 8 (v7x megacore), tile clamped to
    # `tm` (512 default amortizes per-step overhead well on v5e/v6e).
    tmr = min(tm, max(8, _round_up(pl.cdiv(B, 2), 8)))
    if tmr >= B:
        tmr = B                                  # single full-extent row block
    grid_rows = pl.cdiv(B, tmr)
    Rp = grid_rows * tmr

    # Rows-only padding, and only when the tile does not divide B. No feature
    # padding anywhere, so aligned batches have zero wrapper-side copies.
    if Rp != B:
        z_in = jnp.pad(z, ((0, Rp - B), (0, 0)))
        ts_in = jnp.pad(ts2, ((0, Rp - B), (0, 0)))
        t0_in = jnp.pad(t02, ((0, Rp - B), (0, 0)))
    else:
        z_in, ts_in, t0_in = z, ts2, t02

    s_arr = jnp.asarray(s, dtype=jnp.float32).reshape(1, 1)

    kernel = functools.partial(_ode_func_kernel,
                               start_time=float(start_time),
                               end_time=float(end_time))

    # CostEstimate over the rows/dims the kernel actually processes.
    wbytes = prep["w1"].dtype.itemsize
    flops = 2 * Rp * (Dz * Dh + Dh * Dh + Dh * Dz) + 10 * Rp * Dz
    transcendentals = 2 * Rp * Dh
    bytes_accessed = (z.dtype.itemsize * Rp * Dz            # z in
                      + z.dtype.itemsize * Rp * Dz          # dz out
                      + 4 * 2 * Rp                          # ts, t_0
                      + wbytes * (Dz * Dh + Dh * Dh + Dh * Dz)
                      + 4 * (2 * Dz + 2 * Dh + 2 * Dz))     # wt/bt + biases

    # NOTE: the weight/bias operands use constant index_maps, so Pallas fetches
    # them once and does not re-issue their DMAs across grid steps.  For
    # realistic hidden sizes (Dh >= 1024) add pipeline_mode=pl.Buffered(1) to
    # those specs to drop their double buffer; at Dh=32 it is irrelevant.
    dz_full = pl.pallas_call(
        kernel,
        out_shape=jax.ShapeDtypeStruct((Rp, Dz), z.dtype),
        grid_spec=pltpu.PrefetchScalarGridSpec(
            num_scalar_prefetch=0,
            grid=(grid_rows,),
            in_specs=[
                pl.BlockSpec(memory_space=pltpu.MemorySpace.SMEM),  # s (scalar)
                pl.BlockSpec((tmr, Dz), lambda i: (i, 0)),          # z rows
                pl.BlockSpec((tmr, 1), lambda i: (i, 0)),           # ts rows
                pl.BlockSpec((tmr, 1), lambda i: (i, 0)),           # t_0 rows
                pl.BlockSpec((1, Dz), lambda i: (0, 0)),            # w_t
                pl.BlockSpec((1, Dz), lambda i: (0, 0)),            # b_t
                pl.BlockSpec((Dz, Dh), lambda i: (0, 0)),           # W1
                pl.BlockSpec((1, Dh), lambda i: (0, 0)),            # b1
                pl.BlockSpec((Dh, Dh), lambda i: (0, 0)),           # W2
                pl.BlockSpec((1, Dh), lambda i: (0, 0)),            # b2
                pl.BlockSpec((Dh, Dz), lambda i: (0, 0)),           # W3
                pl.BlockSpec((1, Dz), lambda i: (0, 0)),            # b3
            ],
            out_specs=pl.BlockSpec((tmr, Dz), lambda i: (i, 0)),
        ),
        compiler_params=pltpu.CompilerParams(
            dimension_semantics=("parallel",),   # row axis shards over v7x's 2 TCs
        ),
        cost_estimate=pl.CostEstimate(
            flops=flops,
            transcendentals=transcendentals,
            bytes_accessed=bytes_accessed),
    )(s_arr, z_in, ts_in, t0_in,
      prep["wt"], prep["bt"], prep["w1"], prep["b1"],
      prep["w2"], prep["b2"], prep["w3"], prep["b3"])

    dz = dz_full if Rp == B else dz_full[:B]
    return dz, ts, t0


def _reference(s, z, ts, t0, prep, start_time, end_time):
    f32 = jnp.float32
    ratio = (ts.reshape(-1, 1) - t0.reshape(-1, 1)) / (end_time - start_time)
    t = (s - start_time) * ratio + t0.reshape(-1, 1)
    h = z + (t * prep["wt"].astype(f32) + prep["bt"].astype(f32))
    h = jnp.tanh(h @ prep["w1"].astype(f32) + prep["b1"].astype(f32))
    h = jnp.tanh(h @ prep["w2"].astype(f32) + prep["b2"].astype(f32))
    return (h @ prep["w3"].astype(f32) + prep["b3"].astype(f32)) * ratio


if __name__ == "__main__":
    key = jax.random.PRNGKey(0)
    ks = jax.random.split(key, 11)

    z_dim, h_dim = 32, 32
    start_time, end_time = 0.0, 1.0
    s = 0.35

    params = {
        "wt": 0.5 * jax.random.normal(ks[0], (z_dim,), dtype=jnp.float32),
        "bt": 0.1 * jax.random.normal(ks[1], (z_dim,), dtype=jnp.float32),
        "w1": jax.random.normal(ks[2], (z_dim, h_dim), dtype=jnp.float32) / (z_dim ** 0.5),
        "b1": 0.05 * jax.random.normal(ks[3], (h_dim,), dtype=jnp.float32),
        "w2": jax.random.normal(ks[4], (h_dim, h_dim), dtype=jnp.float32) / (h_dim ** 0.5),
        "b2": 0.05 * jax.random.normal(ks[5], (h_dim,), dtype=jnp.float32),
        "w3": jax.random.normal(ks[6], (h_dim, z_dim), dtype=jnp.float32) / (h_dim ** 0.5),
        "b3": 0.05 * jax.random.normal(ks[7], (z_dim,), dtype=jnp.float32),
    }

    # One-time prep (bf16 weights, (1,D) biases) -- reused for every call below,
    # exactly as it would be reused across every ODE solver evaluation.
    prepared = prepare_params(params)

    # B=6: single full-extent block (grid=1, odd batch, no padding).
    # B=64: two row tiles of 32 (grid=2, exercises the "parallel" axis / v7x path).
    for B in (6, 64):
        z = jax.random.normal(ks[8], (B, z_dim), dtype=jnp.float32)
        ts = jax.random.uniform(ks[9], (B, 1), minval=0.5, maxval=1.0, dtype=jnp.float32)
        t0 = jax.random.uniform(ks[10], (B, 1), minval=0.0, maxval=0.1, dtype=jnp.float32)

        dz, ts_out, t0_out = ode_func_forward(
            s, (z, ts, t0), prepared,
            start_time=start_time, end_time=end_time)
        dz = jax.block_until_ready(dz)

        ref = _reference(s, z, ts, t0, prepared, start_time, end_time)

        assert dz.shape == (B, z_dim)
        assert ts_out.shape == ts.shape and t0_out.shape == t0.shape
        # bf16 activations/weights inside the kernel vs f32 reference => loose tol.
        assert jnp.allclose(dz, ref, atol=5e-2, rtol=5e-2), (
            "B=%d max abs err = %e" % (B, float(jnp.max(jnp.abs(dz - ref)))))

    print("KERNEL_OK")
</pallas_src>

<mosaic_0001>
module attributes {stable_mosaic.version = 11 : i64} {
  func.func @_ode_func_kernel(%arg0: i32, %arg1: memref<1x1xf32, #tpu.memory_space<smem>>, %arg2: memref<6x32xf32, #tpu.memory_space<vmem>>, %arg3: memref<6x1xf32, #tpu.memory_space<vmem>>, %arg4: memref<6x1xf32, #tpu.memory_space<vmem>>, %arg5: memref<1x32xf32, #tpu.memory_space<vmem>>, %arg6: memref<1x32xf32, #tpu.memory_space<vmem>>, %arg7: memref<32x32xbf16, #tpu.memory_space<vmem>>, %arg8: memref<1x32xf32, #tpu.memory_space<vmem>>, %arg9: memref<32x32xbf16, #tpu.memory_space<vmem>>, %arg10: memref<1x32xf32, #tpu.memory_space<vmem>>, %arg11: memref<32x32xbf16, #tpu.memory_space<vmem>>, %arg12: memref<1x32xf32, #tpu.memory_space<vmem>>, %arg13: memref<6x32xf32, #tpu.memory_space<vmem>>) attributes {dimension_semantics = [#tpu.dimension_semantics<parallel>], iteration_bounds = array<i64: 1>, scalar_prefetch = 0 : i64, scratch_operands = 0 : i64, tpu.core_type = #tpu.core_type<tc>, window_params = [{transform_indices = @transform_0, window_bounds = array<i64: 1, 1>}, {transform_indices = @transform_1, window_bounds = array<i64: 6, 32>}, {transform_indices = @transform_2, window_bounds = array<i64: 6, 1>}, {transform_indices = @transform_3, window_bounds = array<i64: 6, 1>}, {pipeline_mode = #tpu.pipeline_mode<synchronous>, transform_indices = @transform_4, window_bounds = array<i64: 1, 32>}, {pipeline_mode = #tpu.pipeline_mode<synchronous>, transform_indices = @transform_5, window_bounds = array<i64: 1, 32>}, {pipeline_mode = #tpu.pipeline_mode<synchronous>, transform_indices = @transform_6, window_bounds = array<i64: 32, 32>}, {pipeline_mode = #tpu.pipeline_mode<synchronous>, transform_indices = @transform_7, window_bounds = array<i64: 1, 32>}, {pipeline_mode = #tpu.pipeline_mode<synchronous>, transform_indices = @transform_8, window_bounds = array<i64: 32, 32>}, {pipeline_mode = #tpu.pipeline_mode<synchronous>, transform_indices = @transform_9, window_bounds = array<i64: 1, 32>}, {pipeline_mode = #tpu.pipeline_mode<synchronous>, transform_indices = @transform_10, window_bounds = array<i64: 32, 32>}, {pipeline_mode = #tpu.pipeline_mode<synchronous>, transform_indices = @transform_11, window_bounds = array<i64: 1, 32>}, {transform_indices = @transform_12, window_bounds = array<i64: 6, 32>}]} {
    %c0 = arith.constant 0 : index
    %c0_0 = arith.constant 0 : index
    %0 = memref.load %arg1[%c0, %c0_0] : memref<1x1xf32, #tpu.memory_space<smem>>
    %c0_1 = arith.constant 0 : index
    %c0_2 = arith.constant 0 : index
    %1 = vector.load %arg3[%c0_1, %c0_2] : memref<6x1xf32, #tpu.memory_space<vmem>>, vector<6x1xf32>
    %c0_3 = arith.constant 0 : index
    %c0_4 = arith.constant 0 : index
    %2 = vector.load %arg4[%c0_3, %c0_4] : memref<6x1xf32, #tpu.memory_space<vmem>>, vector<6x1xf32>
    %3 = arith.subf %1, %2 : vector<6x1xf32>
    %cst = arith.constant 1.000000e+00 : f32
    %4 = vector.broadcast %cst : f32 to vector<6x1xf32>
    %5 = arith.mulf %3, %4 : vector<6x1xf32>
    %cst_5 = arith.constant 0.000000e+00 : f32
    %6 = arith.subf %0, %cst_5 : f32
    %7 = vector.broadcast %6 : f32 to vector<6x1xf32>
    %8 = arith.mulf %7, %5 : vector<6x1xf32>
    %9 = arith.addf %8, %2 : vector<6x1xf32>
    %c0_6 = arith.constant 0 : index
    %c0_7 = arith.constant 0 : index
    %10 = vector.load %arg5[%c0_6, %c0_7] : memref<1x32xf32, #tpu.memory_space<vmem>>, vector<1x32xf32>
    %11 = vector.broadcast %9 : vector<6x1xf32> to vector<6x32xf32>
    %12 = vector.broadcast %10 : vector<1x32xf32> to vector<6x32xf32>
    %13 = arith.mulf %11, %12 : vector<6x32xf32>
    %c0_8 = arith.constant 0 : index
    %c0_9 = arith.constant 0 : index
    %14 = vector.load %arg6[%c0_8, %c0_9] : memref<1x32xf32, #tpu.memory_space<vmem>>, vector<1x32xf32>
    %15 = vector.broadcast %14 : vector<1x32xf32> to vector<6x32xf32>
    %16 = arith.addf %13, %15 : vector<6x32xf32>
    %c0_10 = arith.constant 0 : index
    %c0_11 = arith.constant 0 : index
    %17 = vector.load %arg2[%c0_10, %c0_11] : memref<6x32xf32, #tpu.memory_space<vmem>>, vector<6x32xf32>
    %18 = arith.addf %17, %16 : vector<6x32xf32>
    %19 = arith.truncf %18 : vector<6x32xf32> to vector<6x32xbf16>
    %c0_12 = arith.constant 0 : index
    %c0_13 = arith.constant 0 : index
    %20 = vector.load %arg7[%c0_12, %c0_13] : memref<32x32xbf16, #tpu.memory_space<vmem>>, vector<32x32xbf16>
    %cst_14 = arith.constant dense<0.000000e+00> : vector<6x32xf32>
    %21 = tpu.matmul %19, %20, %cst_14 {dimension_numbers = #tpu.dot_dimension_numbers<[1], [0], [0], [1], [0, 0, 1, 1], [], []>} : vector<6x32xbf16>, vector<32x32xbf16>, vector<6x32xf32> -> vector<6x32xf32>
    %c0_15 = arith.constant 0 : index
    %c0_16 = arith.constant 0 : index
    %22 = vector.load %arg8[%c0_15, %c0_16] : memref<1x32xf32, #tpu.memory_space<vmem>>, vector<1x32xf32>
    %23 = vector.broadcast %22 : vector<1x32xf32> to vector<6x32xf32>
    %24 = arith.addf %21, %23 : vector<6x32xf32>
    %25 = arith.truncf %24 : vector<6x32xf32> to vector<6x32xbf16>
    %26 = math.tanh %25 : vector<6x32xbf16>
    %c0_17 = arith.constant 0 : index
    %c0_18 = arith.constant 0 : index
    %27 = vector.load %arg9[%c0_17, %c0_18] : memref<32x32xbf16, #tpu.memory_space<vmem>>, vector<32x32xbf16>
    %cst_19 = arith.constant dense<0.000000e+00> : vector<6x32xf32>
    %28 = tpu.matmul %26, %27, %cst_19 {dimension_numbers = #tpu.dot_dimension_numbers<[1], [0], [0], [1], [0, 0, 1, 1], [], []>} : vector<6x32xbf16>, vector<32x32xbf16>, vector<6x32xf32> -> vector<6x32xf32>
    %c0_20 = arith.constant 0 : index
    %c0_21 = arith.constant 0 : index
    %29 = vector.load %arg10[%c0_20, %c0_21] : memref<1x32xf32, #tpu.memory_space<vmem>>, vector<1x32xf32>
    %30 = vector.broadcast %29 : vector<1x32xf32> to vector<6x32xf32>
    %31 = arith.addf %28, %30 : vector<6x32xf32>
    %32 = arith.truncf %31 : vector<6x32xf32> to vector<6x32xbf16>
    %33 = math.tanh %32 : vector<6x32xbf16>
    %c0_22 = arith.constant 0 : index
    %c0_23 = arith.constant 0 : index
    %34 = vector.load %arg11[%c0_22, %c0_23] : memref<32x32xbf16, #tpu.memory_space<vmem>>, vector<32x32xbf16>
    %cst_24 = arith.constant dense<0.000000e+00> : vector<6x32xf32>
    %35 = tpu.matmul %33, %34, %cst_24 {dimension_numbers = #tpu.dot_dimension_numbers<[1], [0], [0], [1], [0, 0, 1, 1], [], []>} : vector<6x32xbf16>, vector<32x32xbf16>, vector<6x32xf32> -> vector<6x32xf32>
    %c0_25 = arith.constant 0 : index
    %c0_26 = arith.constant 0 : index
    %36 = vector.load %arg12[%c0_25, %c0_26] : memref<1x32xf32, #tpu.memory_space<vmem>>, vector<1x32xf32>
    %37 = vector.broadcast %36 : vector<1x32xf32> to vector<6x32xf32>
    %38 = arith.addf %35, %37 : vector<6x32xf32>
    %39 = vector.broadcast %5 : vector<6x1xf32> to vector<6x32xf32>
    %40 = arith.mulf %38, %39 : vector<6x32xf32>
    %c0_27 = arith.constant 0 : index
    %c0_28 = arith.constant 0 : index
    %41 = vector.load %arg13[%c0_27, %c0_28] : memref<6x32xf32, #tpu.memory_space<vmem>>, vector<6x32xf32>
    tpu.vector_store %arg13[%c0_27, %c0_28], %40 {strides = array<i32>} : memref<6x32xf32, #tpu.memory_space<vmem>>, vector<6x32xf32>,
    return
  }
  func.func @transform_0(%arg0: i32) -> (i32, i32) {
    %c0_i32 = arith.constant 0 : i32
    %c0_i32_0 = arith.constant 0 : i32
    %c0_i32_1 = arith.constant 0 : i32
    return %c0_i32, %c0_i32_0 : i32, i32
  }
  func.func @transform_1(%arg0: i32) -> (i32, i32) {
    %c0_i32 = arith.constant 0 : i32
    %c0_i32_0 = arith.constant 0 : i32
    return %arg0, %c0_i32 : i32, i32
  }
  func.func @transform_2(%arg0: i32) -> (i32, i32) {
    %c0_i32 = arith.constant 0 : i32
    %c0_i32_0 = arith.constant 0 : i32
    return %arg0, %c0_i32 : i32, i32
  }
  func.func @transform_3(%arg0: i32) -> (i32, i32) {
    %c0_i32 = arith.constant 0 : i32
    %c0_i32_0 = arith.constant 0 : i32
    return %arg0, %c0_i32 : i32, i32
  }
  func.func @transform_4(%arg0: i32) -> (i32, i32) {
    %c0_i32 = arith.constant 0 : i32
    %c0_i32_0 = arith.constant 0 : i32
    %c0_i32_1 = arith.constant 0 : i32
    return %c0_i32, %c0_i32_0 : i32, i32
  }
  func.func @transform_5(%arg0: i32) -> (i32, i32) {
    %c0_i32 = arith.constant 0 : i32
    %c0_i32_0 = arith.constant 0 : i32
    %c0_i32_1 = arith.constant 0 : i32
    return %c0_i32, %c0_i32_0 : i32, i32
  }
  func.func @transform_6(%arg0: i32) -> (i32, i32) {
    %c0_i32 = arith.constant 0 : i32
    %c0_i32_0 = arith.constant 0 : i32
    %c0_i32_1 = arith.constant 0 : i32
    return %c0_i32, %c0_i32_0 : i32, i32
  }
  func.func @transform_7(%arg0: i32) -> (i32, i32) {
    %c0_i32 = arith.constant 0 : i32
    %c0_i32_0 = arith.constant 0 : i32
    %c0_i32_1 = arith.constant 0 : i32
    return %c0_i32, %c0_i32_0 : i32, i32
  }
  func.func @transform_8(%arg0: i32) -> (i32, i32) {
    %c0_i32 = arith.constant 0 : i32
    %c0_i32_0 = arith.constant 0 : i32
    %c0_i32_1 = arith.constant 0 : i32
    return %c0_i32, %c0_i32_0 : i32, i32
  }
  func.func @transform_9(%arg0: i32) -> (i32, i32) {
    %c0_i32 = arith.constant 0 : i32
    %c0_i32_0 = arith.constant 0 : i32
    %c0_i32_1 = arith.constant 0 : i32
    return %c0_i32, %c0_i32_0 : i32, i32
  }
  func.func @transform_10(%arg0: i32) -> (i32, i32) {
    %c0_i32 = arith.constant 0 : i32
    %c0_i32_0 = arith.constant 0 : i32
    %c0_i32_1 = arith.constant 0 : i32
    return %c0_i32, %c0_i32_0 : i32, i32
  }
  func.func @transform_11(%arg0: i32) -> (i32, i32) {
    %c0_i32 = arith.constant 0 : i32
    %c0_i32_0 = arith.constant 0 : i32
    %c0_i32_1 = arith.constant 0 : i32
    return %c0_i32, %c0_i32_0 : i32, i32
  }
  func.func @transform_12(%arg0: i32) -> (i32, i32) {
    %c0_i32 = arith.constant 0 : i32
    %c0_i32_0 = arith.constant 0 : i32
    return %arg0, %c0_i32 : i32, i32
  }
}

</mosaic_0001>

<llo_original>
// kernel: tpu_custom_call.1
$region0: #{tpu_custom_call.1}
  #allocation0 [shape = 'u32[]', space=smem, size = 0x4, offset = 0x4, fixed_abs, tag = 'smem constant byte address 0x4 - core index']
  #allocation1 [shape = 'u32[144,128]{1,0:T(1,128)}', space=vmem, size = 0x12000, scoped, tag = 'internal scratch']
  #allocation2 [shape = 'f32[1,1]{1,0:T(1,128)S(6)}', space=smem, size = 0x200, scoped, tag = 'scoped memory for tpu_custom_call.1']
  %s0 = inlined_call_operand.<no memory space> [shape: f32[1,1], index: 0, kind: input, shape index: {}]
  %s1 = inlined_call_operand.hbm [shape: f32[6,32], index: 1, kind: input, shape index: {}]
  %s2 = inlined_call_operand.vmem [shape: f32[6,1], index: 2, kind: input, shape index: {}]
  %s3 = inlined_call_operand.vmem [shape: f32[6,1], index: 3, kind: input, shape index: {}]
  %s4 = inlined_call_operand.hbm [shape: f32[1,32], index: 4, kind: input, shape index: {}]
  %s5 = inlined_call_operand.hbm [shape: f32[1,32], index: 5, kind: input, shape index: {}]
  %s6 = inlined_call_operand.vmem [shape: bf16[32,32], index: 6, kind: input, shape index: {}]
  %s7 = inlined_call_operand.hbm [shape: f32[1,32], index: 7, kind: input, shape index: {}]
  %s8 = inlined_call_operand.vmem [shape: bf16[32,32], index: 8, kind: input, shape index: {}]
  %s9 = inlined_call_operand.vmem [shape: f32[1,32], index: 9, kind: input, shape index: {}]
  %s10 = inlined_call_operand.hbm [shape: bf16[32,32], index: 10, kind: input, shape index: {}]
  %s11 = inlined_call_operand.vmem [shape: f32[1,32], index: 11, kind: input, shape index: {}]
  %s12 = inlined_call_operand.hbm [shape: f32[6,32], index: 12, kind: output, shape index: {}]
  %s13 = sld [smem:[#allocation0]]
  $region78: #{tpu_custom_call.1} parent=0
    _
  %s15 = ssub.s32 1, %s13
  %s16 = scalar_select 0, %s15, %s13
  %17 = sst [smem:[#allocation2]] %s0
  $region1: #{tpu_custom_call.1} parent=0
    #allocation3 [shape = 'u8[4096]{0}', space=vmem, size = 0x1000, scoped, tag = 'input window, operand 1, single buffered']
    #allocation4 [shape = 's32[1]{0}', space=sflag, size = 0x4, scoped, tag = 'scoped memory for tpu_custom_call.1']
    #allocation5 [shape = 's32[1]{0}', space=sflag, size = 0x4, scoped, tag = 'scoped memory for tpu_custom_call.1']
    #allocation6 [shape = 'u8[512]{0}', space=vmem, size = 0x400, scoped, tag = 'input window, operand 4, single buffered']
    #allocation7 [shape = 's32[1]{0}', space=sflag, size = 0x4, scoped, tag = 'scoped memory for tpu_custom_call.1']
    #allocation8 [shape = 'u8[512]{0}', space=vmem, size = 0x400, scoped, tag = 'input window, operand 5, single buffered']
    #allocation9 [shape = 'u8[512]{0}', space=vmem, size = 0x400, scoped, tag = 'input window, operand 7, single buffered']
    #allocation10 [shape = 's32[1]{0}', space=sflag, size = 0x4, scoped, tag = 'scoped memory for tpu_custom_call.1']
    #allocation11 [shape = 'u8[8192]{0}', space=vmem, size = 0x2000, scoped, tag = 'input window, operand 10, single buffered']
    #allocation12 [shape = 'u8[4096]{0}', space=vmem, size = 0x1000, scoped, tag = 'output window, operand 0, single buffered']
    %18 = vsyncpa [#allocation4], 0
    %19 = vsyncpa [#allocation7], 0
    %20 = vsyncpa [#allocation10], 0
    %21 = vsyncpa [#allocation5], 0
    // Predicated region
    $region2: #{tpu_custom_call.1} parent=1 // pred_check
      _
    $region3: #{tpu_custom_call.1} parent=1 // pred_check_branch
      %23 = sbr.rel (0) target = $region5
    $region4: #{tpu_custom_call.1} parent=1 // pred_region
      _
    $region5: #{tpu_custom_call.1} parent=1 // pred_fallthru
      _
    // Predicated region
    $region6: #{tpu_custom_call.1} parent=1 // pred_check
      _
    $region7: #{tpu_custom_call.1} parent=1 // pred_check_branch
      %25 = sbr.rel (0) target = $region9
    $region8: #{tpu_custom_call.1} parent=1 // pred_region
      %s27 = ssub.s32 128, 128
      %28 = vsyncadd [#allocation4], %s27
      %s30 = sshll.u32 [#allocation3], 4
      %s31 = int_to_ptr.vmem [resolvable:$true] %s30
      %33 = dma.hbm_to_vmem [thread:$0]  %s1, 128, %s31, [#allocation4]
    $region9: #{tpu_custom_call.1} parent=1 // pred_fallthru
      _
    // Predicated region
    $region10: #{tpu_custom_call.1} parent=1 // pred_check
      _
    $region11: #{tpu_custom_call.1} parent=1 // pred_check_branch
      %35 = sbr.rel (0) target = $region13
    $region12: #{tpu_custom_call.1} parent=1 // pred_region
      _
    $region13: #{tpu_custom_call.1} parent=1 // pred_fallthru
      _
    // Predicated region
    $region14: #{tpu_custom_call.1} parent=1 // pred_check
      _
    $region15: #{tpu_custom_call.1} parent=1 // pred_check_branch
      %37 = sbr.rel (0) target = $region17
    $region16: #{tpu_custom_call.1} parent=1 // pred_region
      _
    $region17: #{tpu_custom_call.1} parent=1 // pred_fallthru
      _
    // Predicated region
    $region18: #{tpu_custom_call.1} parent=1 // pred_check
      _
    $region19: #{tpu_custom_call.1} parent=1 // pred_check_branch
      %39 = sbr.rel (0) target = $region21
    $region20: #{tpu_custom_call.1} parent=1 // pred_region
      %s41 = ssub.s32 16, 16
      %42 = vsyncadd [#allocation7], %s41
      %s44 = sshll.u32 [#allocation6], 4
      %s45 = int_to_ptr.vmem [resolvable:$true] %s44
      %47 = dma.hbm_to_vmem [thread:$0]  %s4, 16, %s45, [#allocation7]
    $region21: #{tpu_custom_call.1} parent=1 // pred_fallthru
      _
    // Predicated region
    $region22: #{tpu_custom_call.1} parent=1 // pred_check
      _
    $region23: #{tpu_custom_call.1} parent=1 // pred_check_branch
      %49 = sbr.rel (0) target = $region25
    $region24: #{tpu_custom_call.1} parent=1 // pred_region
      %s51 = ssub.s32 16, 16
      %52 = vsyncadd [#allocation7], %s51
      %s54 = sshll.u32 [#allocation8], 4
      %s55 = int_to_ptr.vmem [resolvable:$true] %s54
      %57 = dma.hbm_to_vmem [thread:$0]  %s5, 16, %s55, [#allocation7]
    $region25: #{tpu_custom_call.1} parent=1 // pred_fallthru
      _
    // Predicated region
    $region26: #{tpu_custom_call.1} parent=1 // pred_check
      _
    $region27: #{tpu_custom_call.1} parent=1 // pred_check_branch
      %59 = sbr.rel (0) target = $region29
    $region28: #{tpu_custom_call.1} parent=1 // pred_region
      _
    $region29: #{tpu_custom_call.1} parent=1 // pred_fallthru
      _
    // Predicated region
    $region30: #{tpu_custom_call.1} parent=1 // pred_check
      _
    $region31: #{tpu_custom_call.1} parent=1 // pred_check_branch
      %61 = sbr.rel (0) target = $region33
    $region32: #{tpu_custom_call.1} parent=1 // pred_region
      %s63 = ssub.s32 16, 16
      %64 = vsyncadd [#allocation10], %s63
      %s66 = sshll.u32 [#allocation9], 4
      %s67 = int_to_ptr.vmem [resolvable:$true] %s66
      %69 = dma.hbm_to_vmem [thread:$0]  %s7, 16, %s67, [#allocation10]
    $region33: #{tpu_custom_call.1} parent=1 // pred_fallthru
      _
    // Predicated region
    $region34: #{tpu_custom_call.1} parent=1 // pred_check
      _
    $region35: #{tpu_custom_call.1} parent=1 // pred_check_branch
      %71 = sbr.rel (0) target = $region37
    $region36: #{tpu_custom_call.1} parent=1 // pred_region
      _
    $region37: #{tpu_custom_call.1} parent=1 // pred_fallthru
      _
    // Predicated region
    $region38: #{tpu_custom_call.1} parent=1 // pred_check
      _
    $region39: #{tpu_custom_call.1} parent=1 // pred_check_branch
      %73 = sbr.rel (0) target = $region41
    $region40: #{tpu_custom_call.1} parent=1 // pred_region
      _
    $region41: #{tpu_custom_call.1} parent=1 // pred_fallthru
      _
    // Predicated region
    $region42: #{tpu_custom_call.1} parent=1 // pred_check
      _
    $region43: #{tpu_custom_call.1} parent=1 // pred_check_branch
      %75 = sbr.rel (0) target = $region45
    $region44: #{tpu_custom_call.1} parent=1 // pred_region
      %s77 = ssub.s32 256, 256
      %78 = vsyncadd [#allocation10], %s77
      %s79 = sshll.u32 [#allocation11], 4
      %s80 = int_to_ptr.vmem [resolvable:$true] %s79
      %85 = dma.hbm_to_vmem [thread:$0]  %s10, 256, %s80, [#allocation10], 64, 64, 4
    $region45: #{tpu_custom_call.1} parent=1 // pred_fallthru
      _
    // Predicated region
    $region46: #{tpu_custom_call.1} parent=1 // pred_check
      _
    $region47: #{tpu_custom_call.1} parent=1 // pred_check_branch
      %87 = sbr.rel (0) target = $region49
    $region48: #{tpu_custom_call.1} parent=1 // pred_region
      _
    $region49: #{tpu_custom_call.1} parent=1 // pred_fallthru
      _
    // Predicated region
    $region50: #{tpu_custom_call.1} parent=1 // pred_check
      _
    $region51: #{tpu_custom_call.1} parent=1 // pred_check_branch
      %89 = sbr.rel (0) target = $region53
    $region52: #{tpu_custom_call.1} parent=1 // pred_region
      %90 = dma.done [#allocation4], 128
    $region53: #{tpu_custom_call.1} parent=1 // pred_fallthru
      _
    // Predicated region
    $region54: #{tpu_custom_call.1} parent=1 // pred_check
      _
    $region55: #{tpu_custom_call.1} parent=1 // pred_check_branch
      %92 = sbr.rel (0) target = $region57
    $region56: #{tpu_custom_call.1} parent=1 // pred_region
      %93 = dma.done [#allocation7], 16
    $region57: #{tpu_custom_call.1} parent=1 // pred_fallthru
      _
    // Predicated region
    $region58: #{tpu_custom_call.1} parent=1 // pred_check
      _
    $region59: #{tpu_custom_call.1} parent=1 // pred_check_branch
      %95 = sbr.rel (0) target = $region61
    $region60: #{tpu_custom_call.1} parent=1 // pred_region
      %96 = dma.done [#allocation7], 16
    $region61: #{tpu_custom_call.1} parent=1 // pred_fallthru
      _
    // Predicated region
    $region62: #{tpu_custom_call.1} parent=1 // pred_check
      _
    $region63: #{tpu_custom_call.1} parent=1 // pred_check_branch
      %98 = sbr.rel (0) target = $region65
    $region64: #{tpu_custom_call.1} parent=1 // pred_region
      %99 = dma.done [#allocation10], 16
    $region65: #{tpu_custom_call.1} parent=1 // pred_fallthru
      _
    // Predicated region
    $region66: #{tpu_custom_call.1} parent=1 // pred_check
      _
    $region67: #{tpu_custom_call.1} parent=1 // pred_check_branch
      %101 = sbr.rel (0) target = $region69
    $region68: #{tpu_custom_call.1} parent=1 // pred_region
      %102 = dma.done [#allocation10], 256
    $region69: #{tpu_custom_call.1} parent=1 // pred_fallthru
      _
    %s104 = sld [smem:[#allocation2]]
    %v105 = vld [vmem:[%s2] sm:$0x3f]
    %v106 = vld [vmem:[%s3] sm:$0x3f]
    %v107 = vsub.f32 %v105, %v106
    %v108 = vstv %s104
    %v109 = vmul.f32 %v108, %v107
    %v110 = vadd.f32 %v109, %v106
    %v111 = vld [vmem:[#allocation6] sm:$0x1]
    %113 = vset.pattern.permute.xlu0 0
    %114 = vperm.xlu0 %113, %v110
    %v115 = vpop.permute.xlu0 %114
    %v118 = vlaneseq
    %v119 = vshrl.u32 %v118, 7
    %v120 = vsub.s32 0, %v119
    %v121 = vrot.slane %v111, %v120
    %v123 = vmul.f32 %v115, %v121
    %v124 = vld [vmem:[#allocation8] sm:$0x1]
    %v126 = vlaneseq
    %v127 = vshrl.u32 %v126, 7
    %v128 = vsub.s32 0, %v127
    %v129 = vrot.slane %v124, %v128
    %v131 = vadd.f32 %v123, %v129
    %v132 = vld [vmem:[#allocation3] sm:$0x3f]
    %v133 = vadd.f32 %v132, %v131
    %v134 = vpack.c.bf16 %v133, %v133
    %v135 = vld [vmem:[%s6] sm:$0xf]
    %v136 = vld [vmem:[%s6 + $0x4] sm:$0xf]
    %v137 = vld [vmem:[%s6 + $0x8] sm:$0xf]
    %v138 = vld [vmem:[%s6 + $0xc] sm:$0xf]
    %v139 = vld [vmem:[#allocation9] sm:$0x1]
    %v141 = vlaneseq
    %v142 = vshrl.u32 %v141, 7
    %v143 = vsub.s32 0, %v142
    %v144 = vrot.slane %v139, %v143
    %v150 = vunpack.c.l.b16 %v135
    %v151 = vunpack.c.l.b16 %v136
    %v152 = vunpack.c.l.b16 %v137
    %v153 = vunpack.c.l.b16 %v138
    %v154 = vpack.c.b16 %v151, %v150
    %v155 = vpack.c.b16 %v153, %v152
    %vm158 = vcmask 261120
    %v160 = vsel %vm158, %v134, 0
    %162 = vmatprep.subr.bf16.mxu0 0
    %163 = vmatpush1.bf16.msra.mxu0 0
    %164 = vmatprep.subr.bf16.mxu0 0
    %165 = vmatpush1.bf16.msra.mxu0 0
    %166 = vmatprep.subr.bf16.mxu0 0
    %167 = vmatpush1.bf16.msra.mxu0 0
    %168 = vmatprep.subr.bf16.mxu0 0
    %169 = vmatpush1.bf16.msra.mxu0 0
    %170 = vmatprep.subr.bf16.mxu0 0
    %171 = vmatpush1.bf16.msra.mxu0 0
    %172 = vmatprep.subr.bf16.mxu0 0
    %173 = vmatpush1.bf16.msra.mxu0 0
    %174 = vmatprep.subr.bf16.mxu0 0
    %175 = vmatpush1.bf16.msra.mxu0 %v155
    %176 = vmatprep.subr.bf16.mxu0 0
    %177 = vmatpush1.bf16.msra.mxu0 %v154
    %178 = vmatprep.subr.bf16.mxu0 0
    %179 = vmatpush2.bf16.msra.mxu0 0
    %180 = vmatprep.subr.bf16.mxu0 0
    %181 = vmatpush2.bf16.msra.mxu0 0
    %182 = vmatprep.subr.bf16.mxu0 0
    %183 = vmatpush2.bf16.msra.mxu0 0
    %184 = vmatprep.subr.bf16.mxu0 0
    %185 = vmatpush2.bf16.msra.mxu0 0
    %186 = vmatprep.subr.bf16.mxu0 0
    %187 = vmatpush2.bf16.msra.mxu0 0
    %188 = vmatprep.subr.bf16.mxu0 0
    %189 = vmatpush2.bf16.msra.mxu0 0
    %190 = vmatprep.subr.bf16.mxu0 0
    %191 = vmatpush2.bf16.msra.mxu0 0
    %192 = vmatprep.subr.bf16.mxu0 0
    %193 = vmatpush2.bf16.msra.mxu0 0
    %194 = vmatprep.mubr.bf16.mxu0 0
    %195 = vmatmul.mubr.bf16.gmra.mxu0 %v160
    %v196 = vpop.f32.mrf.mxu0
    %v197 = vadd.f32 %v144, %v196
    %v198 = vpop.f32.mrf.mxu0
    %v199 = vpop.f32.mrf.mxu0
    %v200 = vpop.f32.mrf.mxu0
    %201 = vdwg.mxu0
    %v202 = vpack.c.bf16 %v197, %v197
    %v203 = vtanh.bf16.pop %v202
    %v204 = vld [vmem:[%s8] sm:$0xf]
    %v205 = vld [vmem:[%s8 + $0x4] sm:$0xf]
    %v206 = vld [vmem:[%s8 + $0x8] sm:$0xf]
    %v207 = vld [vmem:[%s8 + $0xc] sm:$0xf]
    %v208 = vld [vmem:[%s9] sm:$0x1]
    %v210 = vlaneseq
    %v211 = vshrl.u32 %v210, 7
    %v212 = vsub.s32 0, %v211
    %v213 = vrot.slane %v208, %v212
    %v219 = vunpack.c.l.b16 %v204
    %v220 = vunpack.c.l.b16 %v205
    %v221 = vunpack.c.l.b16 %v206
    %v222 = vunpack.c.l.b16 %v207
    %v223 = vpack.c.b16 %v220, %v219
    %v224 = vpack.c.b16 %v222, %v221
    %v228 = vsel %vm158, %v203, 0
    %230 = vmatprep.subr.bf16.mxu0 0
    %231 = vmatpush1.bf16.msra.mxu0 0
    %232 = vmatprep.subr.bf16.mxu0 0
    %233 = vmatpush1.bf16.msra.mxu0 0
    %234 = vmatprep.subr.bf16.mxu0 0
    %235 = vmatpush1.bf16.msra.mxu0 0
    %236 = vmatprep.subr.bf16.mxu0 0
    %237 = vmatpush1.bf16.msra.mxu0 0
    %238 = vmatprep.subr.bf16.mxu0 0
    %239 = vmatpush1.bf16.msra.mxu0 0
    %240 = vmatprep.subr.bf16.mxu0 0
    %241 = vmatpush1.bf16.msra.mxu0 0
    %242 = vmatprep.subr.bf16.mxu0 0
    %243 = vmatpush1.bf16.msra.mxu0 %v224
    %244 = vmatprep.subr.bf16.mxu0 0
    %245 = vmatpush1.bf16.msra.mxu0 %v223
    %246 = vmatprep.subr.bf16.mxu0 0
    %247 = vmatpush2.bf16.msra.mxu0 0
    %248 = vmatprep.subr.bf16.mxu0 0
    %249 = vmatpush2.bf16.msra.mxu0 0
    %250 = vmatprep.subr.bf16.mxu0 0
    %251 = vmatpush2.bf16.msra.mxu0 0
    %252 = vmatprep.subr.bf16.mxu0 0
    %253 = vmatpush2.bf16.msra.mxu0 0
    %254 = vmatprep.subr.bf16.mxu0 0
    %255 = vmatpush2.bf16.msra.mxu0 0
    %256 = vmatprep.subr.bf16.mxu0 0
    %257 = vmatpush2.bf16.msra.mxu0 0
    %258 = vmatprep.subr.bf16.mxu0 0
    %259 = vmatpush2.bf16.msra.mxu0 0
    %260 = vmatprep.subr.bf16.mxu0 0
    %261 = vmatpush2.bf16.msra.mxu0 0
    %262 = vmatprep.mubr.bf16.mxu0 0
    %263 = vmatmul.mubr.bf16.gmra.mxu0 %v228
    %v264 = vpop.f32.mrf.mxu0
    %v265 = vadd.f32 %v213, %v264
    %v266 = vpop.f32.mrf.mxu0
    %v267 = vpop.f32.mrf.mxu0
    %v268 = vpop.f32.mrf.mxu0
    %269 = vdwg.mxu0
    %v270 = vpack.c.bf16 %v265, %v265
    %v271 = vtanh.bf16.pop %v270
    %v272 = vld [vmem:[#allocation11] sm:$0xf]
    %v273 = vld [vmem:[#allocation11 + $0x4] sm:$0xf]
    %v274 = vld [vmem:[#allocation11 + $0x8] sm:$0xf]
    %v275 = vld [vmem:[#allocation11 + $0xc] sm:$0xf]
    %v276 = vld [vmem:[%s11] sm:$0x1]
    %v278 = vlaneseq
    %v279 = vshrl.u32 %v278, 7
    %v280 = vsub.s32 0, %v279
    %v281 = vrot.slane %v276, %v280
    %v287 = vunpack.c.l.b16 %v272
    %v288 = vunpack.c.l.b16 %v273
    %v289 = vunpack.c.l.b16 %v274
    %v290 = vunpack.c.l.b16 %v275
    %v291 = vpack.c.b16 %v288, %v287
    %v292 = vpack.c.b16 %v290, %v289
    %v296 = vsel %vm158, %v271, 0
    %298 = vmatprep.subr.bf16.mxu0 0
    %299 = vmatpush1.bf16.msra.mxu0 0
    %300 = vmatprep.subr.bf16.mxu0 0
    %301 = vmatpush1.bf16.msra.mxu0 0
    %302 = vmatprep.subr.bf16.mxu0 0
    %303 = vmatpush1.bf16.msra.mxu0 0
    %304 = vmatprep.subr.bf16.mxu0 0
    %305 = vmatpush1.bf16.msra.mxu0 0
    %306 = vmatprep.subr.bf16.mxu0 0
    %307 = vmatpush1.bf16.msra.mxu0 0
    %308 = vmatprep.subr.bf16.mxu0 0
    %309 = vmatpush1.bf16.msra.mxu0 0
    %310 = vmatprep.subr.bf16.mxu0 0
    %311 = vmatpush1.bf16.msra.mxu0 %v292
    %312 = vmatprep.subr.bf16.mxu0 0
    %313 = vmatpush1.bf16.msra.mxu0 %v291
    %314 = vmatprep.subr.bf16.mxu0 0
    %315 = vmatpush2.bf16.msra.mxu0 0
    %316 = vmatprep.subr.bf16.mxu0 0
    %317 = vmatpush2.bf16.msra.mxu0 0
    %318 = vmatprep.subr.bf16.mxu0 0
    %319 = vmatpush2.bf16.msra.mxu0 0
    %320 = vmatprep.subr.bf16.mxu0 0
    %321 = vmatpush2.bf16.msra.mxu0 0
    %322 = vmatprep.subr.bf16.mxu0 0
    %323 = vmatpush2.bf16.msra.mxu0 0
    %324 = vmatprep.subr.bf16.mxu0 0
    %325 = vmatpush2.bf16.msra.mxu0 0
    %326 = vmatprep.subr.bf16.mxu0 0
    %327 = vmatpush2.bf16.msra.mxu0 0
    %328 = vmatprep.subr.bf16.mxu0 0
    %329 = vmatpush2.bf16.msra.mxu0 0
    %330 = vmatprep.mubr.bf16.mxu0 0
    %331 = vmatmul.mubr.bf16.gmra.mxu0 %v296
    %v332 = vpop.f32.mrf.mxu0
    %v333 = vadd.f32 %v281, %v332
    %v334 = vpop.f32.mrf.mxu0
    %v335 = vpop.f32.mrf.mxu0
    %v336 = vpop.f32.mrf.mxu0
    %337 = vdwg.mxu0
    %339 = vset.pattern.permute.xlu0 0
    %340 = vperm.xlu0 %339, %v107
    %v341 = vpop.permute.xlu0 %340
    %v343 = vmul.f32 %v333, %v341
    %vm344 = vcmask 259072
    %345 = vst.msk [vmem:[#allocation12] sm:$0x3f] %vm344, %v343
    // Predicated region
    $region70: #{tpu_custom_call.1} parent=1 // pred_check
      _
    $region71: #{tpu_custom_call.1} parent=1 // pred_check_branch
      %347 = sbr.rel (0) target = $region73
    $region72: #{tpu_custom_call.1} parent=1 // pred_region
      %s349 = ssub.s32 128, 128
      %350 = vsyncadd [#allocation5], %s349
      %s352 = sshll.u32 [#allocation12], 4
      %s353 = int_to_ptr.vmem [resolvable:$true] %s352
      %355 = dma.vmem_to_hbm [thread:$0]  %s353, 128, %s12, [#allocation5]
    $region73: #{tpu_custom_call.1} parent=1 // pred_fallthru
      _
    // Predicated region
    $region74: #{tpu_custom_call.1} parent=1 // pred_check
      _
    $region75: #{tpu_custom_call.1} parent=1 // pred_check_branch
      %357 = sbr.rel (0) target = $region77
    $region76: #{tpu_custom_call.1} parent=1 // pred_region
      %358 = dma.done [#allocation5], 128
    $region77: #{tpu_custom_call.1} parent=1 // pred_fallthru
      _
    %359 = vsyncpa [#allocation4], 1
    %360 = vsyncpa [#allocation7], 1
    %361 = vsyncpa [#allocation10], 1
    %362 = vsyncpa [#allocation5], 1

</llo_original>
